<compile_context>
chip_gen: v5e
topology: v5e:2x2
jax: 0.10.0
libtpu: 0.0.40
codegen_flags: <defaults>
</compile_context>

<pallas_src>
import functools

import jax
import jax.numpy as jnp
from jax.experimental import pallas as pl
from jax.experimental.pallas import tpu as pltpu

LANES = 128
TM_TARGET = 4096   # target row tile (~2 MiB per f32 stream per step)


def _round_up(x, m):
    return ((x + m - 1) // m) * m


def _sublane_multiple(dtype):
    size = jnp.dtype(dtype).itemsize
    if size >= 4:
        return 8
    if size == 2:
        return 16
    return 32


def _num_tc_splits():
    # Only v7x-class chips have 2 TensorCores; on v5e/v6e a leading split axis
    # is just a serial outer loop (extra init/epilogue), so keep it at 1 there.
    try:
        kind = jax.devices()[0].device_kind.lower()
    except Exception:
        return 1
    return 2 if ("v7" in kind or "7x" in kind) else 1


def _focal_kernel(alpha, gamma, tm, needs_mask, valid_in_last,
                  logits_ref, label_ref, out_ref, acc_ref):
    i = pl.program_id(1)   # row-tile index within split (reduction axis)

    @pl.when(i == 0)
    def _():
        acc_ref[...] = jnp.zeros_like(acc_ref)

    x = logits_ref[...].astype(jnp.float32)   # logits.float()
    y = label_ref[...].astype(jnp.float32)

    is_pos = y == 1.0
    # Algebraic form (binary labels): with s = -x for positives, +x otherwise,
    #   1 - pt              == sigmoid(s)
    #   BCEWithLogits(x, y) == max(s, 0) + log1p(exp(-|s|)),  and |s| == |x|,
    # so a single exp(-|x|) feeds both the sigmoid and the stable BCE term.
    s = jnp.where(is_pos, -x, x)
    e = jnp.exp(-jnp.abs(x))
    inv = pl.reciprocal(1.0 + e, approx=False)          # exact; approx=True -> EUP
    one_minus_pt = jnp.where(s >= 0.0, inv, e * inv)     # == sigmoid(s)
    ce = jnp.maximum(s, 0.0) + jnp.log1p(e)
    alpha_t = jnp.where(is_pos, alpha, 1.0 - alpha)

    g = float(gamma)
    if g == float(int(g)) and 0 <= int(g) <= 4:
        # Small integer gamma -> plain VPU multiplies (no exp/log pair).
        focal_w = None
        for _ in range(int(g)):
            focal_w = one_minus_pt if focal_w is None else focal_w * one_minus_pt
    else:
        focal_w = jnp.power(one_minus_pt, g)

    loss = alpha_t * ce if focal_w is None else alpha_t * focal_w * ce

    if needs_mask:
        # Only the very last tile of the whole grid can contain invalid
        # elements (OOB rows of the partial boundary block + ragged tail
        # zeros); interior tiles skip the mask math entirely.
        is_last_tile = jnp.logical_and(
            pl.program_id(0) == pl.num_programs(0) - 1,
            i == pl.num_programs(1) - 1)

        @pl.when(is_last_tile)
        def _():
            row = jax.lax.broadcasted_iota(jnp.int32, (tm, LANES), 0)
            col = jax.lax.broadcasted_iota(jnp.int32, (tm, LANES), 1)
            local_idx = row * LANES + col            # tile-local, no i32 overflow
            acc_ref[...] += jnp.where(local_idx < valid_in_last, loss, 0.0)

        @pl.when(jnp.logical_not(is_last_tile))
        def _():
            acc_ref[...] += loss
    else:
        acc_ref[...] += loss

    @pl.when(i == pl.num_programs(1) - 1)
    def _():
        # Lane-dense (8, 128) sublane fold (pure VPU); the single cross-lane
        # reduction happens in the wrapper, outside the hot loop.
        out_ref[...] = acc_ref[...].reshape(tm // 8, 8, LANES).sum(axis=0)


def focal_loss_v1(logits, label, *, alpha=0.25, gamma=2.0, reduction="mean"):
    assert logits.shape == label.shape
    total = int(logits.size)
    assert total > 0

    if reduction not in ("mean", "sum"):
        # TODO(synk): reduction='none' would need an elementwise output spec.
        raise NotImplementedError("only 'mean'/'sum' reductions implemented")

    sub = max(_sublane_multiple(logits.dtype), _sublane_multiple(label.dtype))
    rows_raw = pl.cdiv(total, LANES)
    num_splits = _num_tc_splits()

    def _plan(ns):
        steps = max(1, pl.cdiv(rows_raw, ns * TM_TARGET))
        tm = _round_up(pl.cdiv(rows_raw, ns * steps), sub)
        return steps, tm

    steps, tm = _plan(num_splits)
    # Never let a grid block start past the real row count (fully-OOB read);
    # with num_splits == 1 this is impossible by construction.
    while num_splits > 1 and (num_splits * steps - 1) * tm >= rows_raw:
        num_splits -= 1
        steps, tm = _plan(num_splits)
    assert (num_splits * steps - 1) * tm < rows_raw

    rows_covered = num_splits * steps * tm            # >= rows_raw
    needs_mask = rows_covered * LANES != total
    valid_in_last = total - (rows_covered - tm) * LANES   # in (0, tm*LANES]

    # Lane-dense slab. Only the ragged tail inside the last row (< 128 elems)
    # is padded; rows beyond rows_raw are covered by a single partial boundary
    # block and masked in-kernel, so no full-array pad/copy is ever made.
    flat_logits = logits.reshape(-1)
    flat_label = label.reshape(-1)
    tail = rows_raw * LANES - total
    if tail:
        flat_logits = jnp.pad(flat_logits, (0, tail))
        flat_label = jnp.pad(flat_label, (0, tail))
    logits2d = flat_logits.reshape(rows_raw, LANES)
    label2d = flat_label.reshape(rows_raw, LANES)

    kernel = functools.partial(_focal_kernel, float(alpha), float(gamma),
                               tm, needs_mask, valid_in_last)

    partials = pl.pallas_call(
        kernel,
        out_shape=jax.ShapeDtypeStruct((num_splits * 8, LANES), jnp.float32),
        grid_spec=pltpu.PrefetchScalarGridSpec(
            num_scalar_prefetch=0,
            grid=(num_splits, steps),
            in_specs=[
                pl.BlockSpec((tm, LANES), lambda c, i, s=steps: (c * s + i, 0)),
                pl.BlockSpec((tm, LANES), lambda c, i, s=steps: (c * s + i, 0)),
            ],
            out_specs=pl.BlockSpec((8, LANES), lambda c, i: (c, 0)),
            scratch_shapes=[pltpu.VMEM((tm, LANES), jnp.float32)],
        ),
        compiler_params=pltpu.CompilerParams(
            dimension_semantics=("parallel", "arbitrary"),
            vmem_limit_bytes=32 * 1024 * 1024,
        ),
    )(logits2d, label2d)

    loss_sum = jnp.sum(partials)
    if reduction == "mean":
        return loss_sum / jnp.float32(total)
    return loss_sum


def _reference_focal_loss(logits, label, alpha=0.25, gamma=2.0):
    logits = logits.astype(jnp.float32)
    label_f = label.astype(jnp.float32)
    alpha_t = jnp.where(label_f == 1.0, alpha, 1.0 - alpha)
    probs = jax.nn.sigmoid(logits)
    pt = jnp.where(label_f == 1.0, probs, 1.0 - probs)
    ce = jnp.maximum(logits, 0.0) - logits * label_f + jnp.log1p(
        jnp.exp(-jnp.abs(logits)))
    loss = alpha_t * jnp.power(1.0 - pt, gamma) * ce
    return jnp.mean(loss)


if __name__ == "__main__":
    key = jax.random.PRNGKey(0)
    k1, k2, k3, k4 = jax.random.split(key, 4)

    # Small NCHW-style shape consistent with a dense-prediction focal loss
    # (element count divisible by 128 -> no tail pad, no in-kernel mask).
    shape = (2, 4, 16, 16)
    logits = jax.random.normal(k1, shape, dtype=jnp.float32)
    label = jax.random.bernoulli(k2, p=0.3, shape=shape).astype(jnp.float32)

    out = focal_loss_v1(logits, label, alpha=0.25, gamma=2.0, reduction="mean")
    out = jax.block_until_ready(out)
    ref = _reference_focal_loss(logits, label)
    assert jnp.allclose(out, ref, rtol=1e-4, atol=1e-6), (out, ref)

    # Ragged shape exercising the partial boundary block + gated in-kernel
    # mask (element count % 128 != 0, row count not a multiple of the tile).
    shape2 = (3, 5, 7, 11)
    logits2 = jax.random.normal(k3, shape2, dtype=jnp.float32)
    label2 = jax.random.bernoulli(k4, p=0.3, shape=shape2).astype(jnp.float32)

    out2 = focal_loss_v1(logits2, label2, alpha=0.25, gamma=2.0,
                         reduction="mean")
    out2 = jax.block_until_ready(out2)
    ref2 = _reference_focal_loss(logits2, label2)
    assert jnp.allclose(out2, ref2, rtol=1e-4, atol=1e-6), (out2, ref2)

    print("KERNEL_OK")
</pallas_src>

<mosaic_0001>
module attributes {stable_mosaic.version = 11 : i64} {
  func.func @_focal_kernel(%arg0: i32, %arg1: i32, %arg2: memref<16x128xf32, #tpu.memory_space<vmem>>, %arg3: memref<16x128xf32, #tpu.memory_space<vmem>>, %arg4: memref<8x128xf32, #tpu.memory_space<vmem>>, %arg5: memref<16x128xf32, #tpu.memory_space<vmem>>) attributes {dimension_semantics = [#tpu.dimension_semantics<parallel>, #tpu.dimension_semantics<arbitrary>], iteration_bounds = array<i64: 1, 1>, scalar_prefetch = 0 : i64, scratch_operands = 1 : i64, tpu.core_type = #tpu.core_type<tc>, window_params = [{transform_indices = @transform_0, window_bounds = array<i64: 16, 128>}, {transform_indices = @transform_1, window_bounds = array<i64: 16, 128>}, {transform_indices = @transform_2, window_bounds = array<i64: 8, 128>}]} {
    %c0_i32 = arith.constant 0 : i32
    %0 = arith.cmpi eq, %arg1, %c0_i32 : i32
    %1 = arith.extui %0 : i1 to i32
    %c0_i32_0 = arith.constant 0 : i32
    %2 = arith.cmpi ne, %1, %c0_i32_0 : i32
    scf.if %2 {
      %cst_17 = arith.constant 0.000000e+00 : f32
      %37 = vector.broadcast %cst_17 : f32 to vector<16x128xf32>
      %c0_18 = arith.constant 0 : index
      %c0_19 = arith.constant 0 : index
      %38 = vector.load %arg5[%c0_18, %c0_19] : memref<16x128xf32, #tpu.memory_space<vmem>>, vector<16x128xf32>
      tpu.vector_store %arg5[%c0_18, %c0_19], %37 {strides = array<i32>} : memref<16x128xf32, #tpu.memory_space<vmem>>, vector<16x128xf32>,
    } else {
    }
    %c0 = arith.constant 0 : index
    %c0_1 = arith.constant 0 : index
    %3 = vector.load %arg2[%c0, %c0_1] : memref<16x128xf32, #tpu.memory_space<vmem>>, vector<16x128xf32>
    %c0_2 = arith.constant 0 : index
    %c0_3 = arith.constant 0 : index
    %4 = vector.load %arg3[%c0_2, %c0_3] : memref<16x128xf32, #tpu.memory_space<vmem>>, vector<16x128xf32>
    %cst = arith.constant 1.000000e+00 : f32
    %5 = vector.broadcast %cst : f32 to vector<16x128xf32>
    %6 = arith.cmpf oeq, %4, %5 : vector<16x128xf32>
    %cst_4 = arith.constant 0.000000e+00 : f32
    %7 = vector.broadcast %cst_4 : f32 to vector<16x128xf32>
    %8 = arith.subf %7, %3 : vector<16x128xf32>
    %9 = arith.select %6, %8, %3 : vector<16x128xi1>, vector<16x128xf32>
    %10 = math.absf %3 : vector<16x128xf32>
    %cst_5 = arith.constant 0.000000e+00 : f32
    %11 = vector.broadcast %cst_5 : f32 to vector<16x128xf32>
    %12 = arith.subf %11, %10 : vector<16x128xf32>
    %13 = math.exp %12 : vector<16x128xf32>
    %cst_6 = arith.constant 1.000000e+00 : f32
    %14 = vector.broadcast %cst_6 : f32 to vector<16x128xf32>
    %15 = arith.addf %14, %13 : vector<16x128xf32>
    %16 = tpu.reciprocal %15 : vector<16x128xf32> -> vector<16x128xf32>
    %cst_7 = arith.constant 0.000000e+00 : f32
    %17 = vector.broadcast %cst_7 : f32 to vector<16x128xf32>
    %18 = arith.cmpf oge, %9, %17 : vector<16x128xf32>
    %19 = arith.mulf %13, %16 : vector<16x128xf32>
    %20 = arith.select %18, %16, %19 : vector<16x128xi1>, vector<16x128xf32>
    %cst_8 = arith.constant 0.000000e+00 : f32
    %21 = vector.broadcast %cst_8 : f32 to vector<16x128xf32>
    %22 = arith.maximumf %9, %21 : vector<16x128xf32>
    %23 = math.log1p %13 : vector<16x128xf32>
    %24 = arith.addf %22, %23 : vector<16x128xf32>
    %cst_9 = arith.constant 2.500000e-01 : f32
    %cst_10 = arith.constant 7.500000e-01 : f32
    %25 = vector.broadcast %cst_9 : f32 to vector<16x128xf32>
    %26 = vector.broadcast %cst_10 : f32 to vector<16x128xf32>
    %27 = arith.select %6, %25, %26 : vector<16x128xi1>, vector<16x128xf32>
    %28 = arith.mulf %20, %20 : vector<16x128xf32>
    %29 = arith.mulf %27, %28 : vector<16x128xf32>
    %30 = arith.mulf %29, %24 : vector<16x128xf32>
    %c0_11 = arith.constant 0 : index
    %c0_12 = arith.constant 0 : index
    %31 = vector.load %arg5[%c0_11, %c0_12] : memref<16x128xf32, #tpu.memory_space<vmem>>, vector<16x128xf32>
    %32 = arith.addf %31, %30 : vector<16x128xf32>
    %c0_13 = arith.constant 0 : index
    %c0_14 = arith.constant 0 : index
    %33 = vector.load %arg5[%c0_13, %c0_14] : memref<16x128xf32, #tpu.memory_space<vmem>>, vector<16x128xf32>
    tpu.vector_store %arg5[%c0_13, %c0_14], %32 {strides = array<i32>} : memref<16x128xf32, #tpu.memory_space<vmem>>, vector<16x128xf32>,
    %c0_i32_15 = arith.constant 0 : i32
    %34 = arith.cmpi eq, %arg1, %c0_i32_15 : i32
    %35 = arith.extui %34 : i1 to i32
    %c0_i32_16 = arith.constant 0 : i32
    %36 = arith.cmpi ne, %35, %c0_i32_16 : i32
    scf.if %36 {
      %c0_17 = arith.constant 0 : index
      %c0_18 = arith.constant 0 : index
      %37 = vector.load %arg5[%c0_17, %c0_18] : memref<16x128xf32, #tpu.memory_space<vmem>>, vector<16x128xf32>
      %38 = vector.shape_cast %37 : vector<16x128xf32> to vector<2x8x128xf32>
      %cst_19 = arith.constant dense<0.000000e+00> : vector<8x128xf32>
      %39 = vector.multi_reduction <add>, %38, %cst_19 [0] : vector<2x8x128xf32> to vector<8x128xf32>
      %c0_20 = arith.constant 0 : index
      %c0_21 = arith.constant 0 : index
      %40 = vector.load %arg4[%c0_20, %c0_21] : memref<8x128xf32, #tpu.memory_space<vmem>>, vector<8x128xf32>
      tpu.vector_store %arg4[%c0_20, %c0_21], %39 {strides = array<i32>} : memref<8x128xf32, #tpu.memory_space<vmem>>, vector<8x128xf32>,
    } else {
    }
    return
  }
  func.func @transform_0(%arg0: i32, %arg1: i32) -> (i32, i32) {
    %c1_i32 = arith.constant 1 : i32
    %0 = arith.muli %arg0, %c1_i32 : i32
    %1 = arith.addi %0, %arg1 : i32
    %c0_i32 = arith.constant 0 : i32
    %c0_i32_0 = arith.constant 0 : i32
    return %1, %c0_i32 : i32, i32
  }
  func.func @transform_1(%arg0: i32, %arg1: i32) -> (i32, i32) {
    %c1_i32 = arith.constant 1 : i32
    %0 = arith.muli %arg0, %c1_i32 : i32
    %1 = arith.addi %0, %arg1 : i32
    %c0_i32 = arith.constant 0 : i32
    %c0_i32_0 = arith.constant 0 : i32
    return %1, %c0_i32 : i32, i32
  }
  func.func @transform_2(%arg0: i32, %arg1: i32) -> (i32, i32) {
    %c0_i32 = arith.constant 0 : i32
    %c0_i32_0 = arith.constant 0 : i32
    return %arg0, %c0_i32 : i32, i32
  }
}

</mosaic_0001>

<llo_original>
// kernel: tpu_custom_call.1
$region0: #{tpu_custom_call.1}
  #allocation0 [shape = 'u32[]', space=smem, size = 0x4, offset = 0x4, fixed_abs, tag = 'smem constant byte address 0x4 - core index']
  #allocation1 [shape = 'u32[72,128]{1,0:T(1,128)}', space=vmem, size = 0x9000, scoped, tag = 'internal scratch']
  #allocation2 [shape = 'f32[16,128]{1,0:T(8,128)}', space=vmem, size = 0x2000, scoped, tag = 'scratch operand']
  %s0 = inlined_call_operand.hbm [shape: f32[16,128], index: 0, kind: input, shape index: {}]
  %s1 = inlined_call_operand.hbm [shape: f32[16,128], index: 1, kind: input, shape index: {}]
  %s2 = inlined_call_operand.hbm [shape: f32[8,128], index: 2, kind: output, shape index: {}]
  %s3 = sld [smem:[#allocation0]]
  $region34: #{tpu_custom_call.1} parent=0
    _
  %s5 = ssub.s32 1, %s3
  %s6 = scalar_select 0, %s5, %s3
  $region1: #{tpu_custom_call.1} parent=0
    #allocation3 [shape = 'u8[8192]{0}', space=vmem, size = 0x2000, scoped, tag = 'input window, operand 0, single buffered']
    #allocation4 [shape = 's32[1]{0}', space=sflag, size = 0x4, scoped, tag = 'scoped memory for tpu_custom_call.1']
    #allocation5 [shape = 's32[1]{0}', space=sflag, size = 0x4, scoped, tag = 'scoped memory for tpu_custom_call.1']
    #allocation6 [shape = 'u8[8192]{0}', space=vmem, size = 0x2000, scoped, tag = 'input window, operand 1, single buffered']
    #allocation7 [shape = 's32[1]{0}', space=sflag, size = 0x4, scoped, tag = 'scoped memory for tpu_custom_call.1']
    #allocation8 [shape = 'u8[4096]{0}', space=vmem, size = 0x1000, scoped, tag = 'output window, operand 0, single buffered']
    %7 = vsyncpa [#allocation4], 0
    %8 = vsyncpa [#allocation7], 0
    %9 = vsyncpa [#allocation5], 0
    // Predicated region
    $region2: #{tpu_custom_call.1} parent=1 // pred_check
      _
    $region3: #{tpu_custom_call.1} parent=1 // pred_check_branch
      %11 = sbr.rel (0) target = $region5
    $region4: #{tpu_custom_call.1} parent=1 // pred_region
      %s12 = sadd.s32 0, 0
      %s13 = smul.u32 2, %s12
      %15 = vsyncadd [#allocation4], 0
      %s16 = smul.addr %s13, 8
      %s17 = scalar_lea.hbm %s0, %s16
      %s18 = sshll.u32 %s17, 4
      %s19 = int_to_ptr.hbm [resolvable:$true] %s18
      %s20 = sshll.u32 [#allocation3], 4
      %s21 = int_to_ptr.vmem [resolvable:$true] %s20
      %26 = dma.hbm_to_vmem [thread:$0]  %s19, 256, %s21, [#allocation4], 128, 128, 8
    $region5: #{tpu_custom_call.1} parent=1 // pred_fallthru
      _
    // Predicated region
    $region6: #{tpu_custom_call.1} parent=1 // pred_check
      _
    $region7: #{tpu_custom_call.1} parent=1 // pred_check_branch
      %28 = sbr.rel (0) target = $region9
    $region8: #{tpu_custom_call.1} parent=1 // pred_region
      %s29 = sadd.s32 0, 0
      %s30 = smul.u32 2, %s29
      %32 = vsyncadd [#allocation7], 0
      %s33 = smul.addr %s30, 8
      %s34 = scalar_lea.hbm %s1, %s33
      %s35 = sshll.u32 %s34, 4
      %s36 = int_to_ptr.hbm [resolvable:$true] %s35
      %s37 = sshll.u32 [#allocation6], 4
      %s38 = int_to_ptr.vmem [resolvable:$true] %s37
      %43 = dma.hbm_to_vmem [thread:$0]  %s36, 256, %s38, [#allocation7], 128, 128, 8
    $region9: #{tpu_custom_call.1} parent=1 // pred_fallthru
      _
    // Predicated region
    $region10: #{tpu_custom_call.1} parent=1 // pred_check
      _
    $region11: #{tpu_custom_call.1} parent=1 // pred_check_branch
      %45 = sbr.rel (0) target = $region13
    $region12: #{tpu_custom_call.1} parent=1 // pred_region
      %47 = dma.done [#allocation4], 256
    $region13: #{tpu_custom_call.1} parent=1 // pred_fallthru
      _
    // Predicated region
    $region14: #{tpu_custom_call.1} parent=1 // pred_check
      _
    $region15: #{tpu_custom_call.1} parent=1 // pred_check_branch
      %49 = sbr.rel (0) target = $region17
    $region16: #{tpu_custom_call.1} parent=1 // pred_region
      %51 = dma.done [#allocation7], 256
    $region17: #{tpu_custom_call.1} parent=1 // pred_fallthru
      _
    %s52 = sadd.s32 0, 0
    %s53 = smul.u32 2, %s52
    %s54 = sadd.s32 0, 0
    %s55 = smul.u32 2, %s54
    %p56 = scmp.eq.s32.totalorder 0, 0
    // Predicated region
    $region18: #{tpu_custom_call.1} parent=1 // pred_check
      %p57 = pneg %p56
    $region19: #{tpu_custom_call.1} parent=1 // pred_check_branch
      %59 = sbr.rel (%p57) target = $region21
    $region20: #{tpu_custom_call.1} parent=1 // pred_region
      %60 = vst [vmem:[#allocation2] sm:$0xff] 0.0
      %61 = vst [vmem:[#allocation2 + $0x8] sm:$0xff] 0.0
    $region21: #{tpu_custom_call.1} parent=1 // pred_fallthru
      _
    %v62 = vld [vmem:[#allocation3] sm:$0xff]
    %v63 = vld [vmem:[#allocation3 + $0x8] sm:$0xff]
    %v64 = vld [vmem:[#allocation6] sm:$0xff]
    %v65 = vld [vmem:[#allocation6 + $0x8] sm:$0xff]
    %vm66 = vcmp.eq.f32.partialorder %v64, 1.0
    %vm67 = vcmp.eq.f32.partialorder %v65, 1.0
    %v68 = vsub.f32 0.0, %v62
    %v69 = vsub.f32 0.0, %v63
    %v70 = vsel %vm66, %v68, %v62
    %v71 = vsel %vm67, %v69, %v63
    %v72 = vand.u32 2147483647, %v62
    %v73 = vand.u32 2147483647, %v63
    %v74 = vsub.f32 0.0, %v72
    %v75 = vsub.f32 0.0, %v73
    %v76 = vmul.f32 %v74, 1.442695
    %v77 = vpow.pop %v76
    %v78 = vmul.f32 %v75, 1.442695
    %v79 = vpow.pop %v78
    %v80 = vadd.f32 %v77, 1.0
    %v81 = vadd.f32 %v79, 1.0
    %v82 = vrcp.pop %v80
    %v83 = vmul.f32 %v80, %v82
    %v84 = vsub.f32 1.0, %v83
    %v85 = vmul.f32 %v82, %v84
    %v86 = vadd.f32 %v82, %v85
    %vm87 = vweird.f32 %v80
    %vm88 = vweird.f32 %v82
    %vm89 = vmor %vm87, %vm88
    %v90 = vsel %vm89, %v82, %v86
    %v91 = vand.u32 2147483647, %v80
    %vm92 = vcmp.eq.f32.partialorder %v91, 8.507059e+37
    %v93 = vand.u32 %v80, 2147483648
    %v94 = vor.u32 1.1754944e-38, %v93
    %v95 = vsel %vm92, %v94, %v90
    %v96 = vrcp.pop %v81
    %v97 = vmul.f32 %v81, %v96
    %v98 = vsub.f32 1.0, %v97
    %v99 = vmul.f32 %v96, %v98
    %v100 = vadd.f32 %v96, %v99
    %vm101 = vweird.f32 %v81
    %vm102 = vweird.f32 %v96
    %vm103 = vmor %vm101, %vm102
    %v104 = vsel %vm103, %v96, %v100
    %v105 = vand.u32 2147483647, %v81
    %vm106 = vcmp.eq.f32.partialorder %v105, 8.507059e+37
    %v107 = vand.u32 %v81, 2147483648
    %v108 = vor.u32 1.1754944e-38, %v107
    %v109 = vsel %vm106, %v108, %v104
    %vm110 = vcmp.ge.f32.partialorder %v70, 0.0
    %vm111 = vcmp.ge.f32.partialorder %v71, 0.0
    %v112 = vmul.f32 %v77, %v95
    %v113 = vmul.f32 %v79, %v109
    %v114 = vsel %vm110, %v95, %v112
    %v115 = vsel %vm111, %v109, %v113
    %v116 = vmax.f32 %v70, 0.0
    %v117 = vmax.f32 %v71, 0.0
    %v118 = vadd.f32 %v77, 1.0
    %v119 = vlog2.pop %v118
    %v120 = vmul.f32 %v119, 0.6931472
    %v121 = vmul.f32 -0.5, %v77
    %v122 = vadd.f32 %v121, 1.0
    %v123 = vmul.f32 %v122, %v77
    %v124 = vand.u32 2147483647, %v77
    %vm125 = vcmp.lt.f32.partialorder %v124, 0.0004427343
    %v126 = vsel %vm125, %v123, %v120
    %v127 = vadd.f32 %v79, 1.0
    %v128 = vlog2.pop %v127
    %v129 = vmul.f32 %v128, 0.6931472
    %v130 = vmul.f32 -0.5, %v79
    %v131 = vadd.f32 %v130, 1.0
    %v132 = vmul.f32 %v131, %v79
    %v133 = vand.u32 2147483647, %v79
    %vm134 = vcmp.lt.f32.partialorder %v133, 0.0004427343
    %v135 = vsel %vm134, %v132, %v129
    %v136 = vadd.f32 %v116, %v126
    %v137 = vadd.f32 %v117, %v135
    %v138 = vsel %vm66, 0.25, 0.75
    %v139 = vsel %vm67, 0.25, 0.75
    %v140 = vmul.f32 %v114, %v114
    %v141 = vmul.f32 %v115, %v115
    %v142 = vmul.f32 %v138, %v140
    %v143 = vmul.f32 %v139, %v141
    %v144 = vmul.f32 %v142, %v136
    %v145 = vmul.f32 %v143, %v137
    %v146 = vld [vmem:[#allocation2] sm:$0xff]
    %v147 = vld [vmem:[#allocation2 + $0x8] sm:$0xff]
    %v148 = vadd.f32 %v146, %v144
    %v149 = vadd.f32 %v147, %v145
    %150 = vst [vmem:[#allocation2] sm:$0xff] %v148
    %151 = vst [vmem:[#allocation2 + $0x8] sm:$0xff] %v149
    // Predicated region
    $region22: #{tpu_custom_call.1} parent=1 // pred_check
      %p152 = pneg %p56
    $region23: #{tpu_custom_call.1} parent=1 // pred_check_branch
      %154 = sbr.rel (%p152) target = $region25
    $region24: #{tpu_custom_call.1} parent=1 // pred_region
      %v155 = vld [vmem:[#allocation2] sm:$0xff]
      %v156 = vld [vmem:[#allocation2 + $0x8] sm:$0xff]
      %v157 = vadd.f32 %v155, %v156
      %158 = vst [vmem:[#allocation8] sm:$0xff] %v157
    $region25: #{tpu_custom_call.1} parent=1 // pred_fallthru
      _
    // Predicated region
    $region26: #{tpu_custom_call.1} parent=1 // pred_check
      _
    $region27: #{tpu_custom_call.1} parent=1 // pred_check_branch
      %160 = sbr.rel (0) target = $region29
    $region28: #{tpu_custom_call.1} parent=1 // pred_region
      %162 = vsyncadd [#allocation5], 0
      %s164 = sshll.u32 [#allocation8], 4
      %s165 = int_to_ptr.vmem [resolvable:$true] %s164
      %s166 = sshll.u32 %s2, 4
      %s167 = int_to_ptr.hbm [resolvable:$true] %s166
      %169 = dma.vmem_to_hbm [thread:$0]  %s165, 128, %s167, [#allocation5]
    $region29: #{tpu_custom_call.1} parent=1 // pred_fallthru
      _
    // Predicated region
    $region30: #{tpu_custom_call.1} parent=1 // pred_check
      _
    $region31: #{tpu_custom_call.1} parent=1 // pred_check_branch
      %171 = sbr.rel (0) target = $region33
    $region32: #{tpu_custom_call.1} parent=1 // pred_region
      %173 = dma.done [#allocation5], 128
    $region33: #{tpu_custom_call.1} parent=1 // pred_fallthru
      _
    %174 = vsyncpa [#allocation4], 1
    %175 = vsyncpa [#allocation7], 1
    %176 = vsyncpa [#allocation5], 1

</llo_original>
